<compile_context>
chip_gen: v6e
topology: v6e:2x2x1
jax: 0.10.0
libtpu: 0.0.40
codegen_flags: <defaults>
</compile_context>

<pallas_src>
import functools

import jax
import jax.numpy as jnp
from jax.experimental import pallas as pl
from jax.experimental.pallas import tpu as pltpu

LEAKY_SLOPE = 0.01  # PyTorch F.leaky_relu default negative_slope
LANE = 128


def _leaky_relu(x):
    # slope < 1  =>  max(x, slope*x) == leaky_relu(x)
    return jnp.maximum(x, LEAKY_SLOPE * x)


def dueling_dqn_kernel(obs_ref, slab_ref, out_ref, *, s_pad):
    """obs_ref: (TB,1) int32, slab_ref: (s_pad + 2*128, 128) f32, out_ref: (TB,128) f32."""
    tb = obs_ref.shape[0]

    # --- fused embedding+fc1 gather as a one-hot matmul (no dynamic indexing) ---
    obs = obs_ref[...]                                                # (TB, 1) int32
    lane_ids = jax.lax.broadcasted_iota(jnp.int32, (tb, s_pad), 1)    # (TB, s_pad)
    onehot = (lane_ids == obs).astype(jnp.float32)                    # exact 0/1

    t_blk = slab_ref[0:s_pad, :]                                      # (s_pad, 128)
    # row s: [0:n0] = emb[s] @ W1^T + b1, col 127 = 1.0 (bias carry), rest 0
    h = _leaky_relu(jnp.dot(onehot, t_blk, preferred_element_type=jnp.float32))
    # h cols: [0:n0] = leaky_relu(fc1 out), col 127 = 1.0, rest exactly 0

    # --- fused hidden layer: [fc_h_v | fc_h_a] + leaky_relu ---------------------
    wh_blk = slab_ref[s_pad:s_pad + LANE, :]
    hz = _leaky_relu(jnp.dot(h, wh_blk, preferred_element_type=jnp.float32))
    # hz cols: [0:n1] = hv, [n1:2n1] = ha, col 127 = 1.0, rest exactly 0

    # --- fused head with dueling combine folded into the weights ----------------
    wz_blk = slab_ref[s_pad + LANE:s_pad + 2 * LANE, :]
    # cols 0..A-1 already equal Q = value + advantage - mean(advantage);
    # cols A..127 are exactly zero (wz_blk zero there).  Single store epilogue.
    out_ref[...] = jnp.dot(hz, wz_blk, preferred_element_type=jnp.float32)


def init_params(key, state_shape, action_shape, number_of_nodes):
    """Deterministic synthetic parameters with the same shapes as the PyTorch module."""
    n0, n1 = number_of_nodes
    ks = jax.random.split(key, 11)

    def lin(kw, kb, out_f, in_f):
        # PyTorch nn.Linear layout: weight (out, in), bias (out,)
        w = jax.random.uniform(kw, (out_f, in_f), jnp.float32, -0.5, 0.5) / jnp.sqrt(in_f)
        b = jax.random.uniform(kb, (out_f,), jnp.float32, -0.5, 0.5) / jnp.sqrt(in_f)
        return w, b

    params = {}
    params["emb"] = jax.random.normal(ks[0], (state_shape, 4), jnp.float32)
    params["fc1"] = lin(ks[1], ks[2], n0, 4)
    params["fc_h_v"] = lin(ks[3], ks[4], n1, n0)
    params["fc_h_a"] = lin(ks[5], ks[6], n1, n0)
    params["fc_z_v"] = lin(ks[7], ks[8], 1, n1)
    params["fc_z_a"] = lin(ks[9], ks[10], action_shape, n1)
    return params


def prepare_params(params, action_shape):
    """One-time prep: fold emb+fc1 and the dueling combine, pack one lane-dense slab."""
    emb = params["emb"].astype(jnp.float32)        # (S, 4)
    w1, b1 = params["fc1"]                         # (n0, 4), (n0,)
    whv, bhv = params["fc_h_v"]                    # (n1, n0), (n1,)
    wha, bha = params["fc_h_a"]                    # (n1, n0), (n1,)
    wzv, bzv = params["fc_z_v"]                    # (1, n1), (1,)
    wza, bza = params["fc_z_a"]                    # (A, n1), (A,)

    S = emb.shape[0]
    n0 = w1.shape[0]
    n1 = whv.shape[0]
    A = action_shape
    assert n0 < LANE and 2 * n1 < LANE and A < LANE
    s_pad = ((S + 7) // 8) * 8                     # sublane (8) aligned, not 128

    # Folded embedding+fc1 table: row s = emb[s] @ W1^T + b1, ones-carry in lane 127.
    table = emb @ w1.T + b1                        # (S, n0)
    t_blk = jnp.zeros((s_pad, LANE), jnp.float32)
    t_blk = t_blk.at[:S, :n0].set(table)
    t_blk = t_blk.at[:S, LANE - 1].set(1.0)        # rows >= S stay all-zero (no bounds check)

    # Fused hidden block: [W_h_v^T | W_h_a^T], biases in row 127, ones-carry at [127,127].
    wh_blk = jnp.zeros((LANE, LANE), jnp.float32)
    wh_blk = wh_blk.at[:n0, :n1].set(whv.T)
    wh_blk = wh_blk.at[:n0, n1:2 * n1].set(wha.T)
    wh_blk = wh_blk.at[LANE - 1, :n1].set(bhv)
    wh_blk = wh_blk.at[LANE - 1, n1:2 * n1].set(bha)
    wh_blk = wh_blk.at[LANE - 1, LANE - 1].set(1.0)

    # Fused head with the dueling combine folded in offline:
    #   Q_j = hv @ wzv^T + bzv + ha @ (Wza[j] - mean_k Wza[k]) + (bza_j - mean(bza))
    wza_c = wza - jnp.mean(wza, axis=0, keepdims=True)   # (A, n1)
    bz_c = bza - jnp.mean(bza) + bzv[0]                  # (A,)
    wz_blk = jnp.zeros((LANE, LANE), jnp.float32)
    wz_blk = wz_blk.at[:n1, :A].set(jnp.broadcast_to(wzv[0][:, None], (n1, A)))
    wz_blk = wz_blk.at[n1:2 * n1, :A].set(wza_c.T)
    wz_blk = wz_blk.at[LANE - 1, :A].set(bz_c)
    # columns A..127 stay exactly zero -> output lanes A..127 are exactly zero.

    slab = jnp.concatenate([t_blk, wh_blk, wz_blk], axis=0)  # (s_pad + 256, 128)
    return {"slab": slab, "s_pad": int(s_pad), "action_shape": A}


def bl_dueling_dqn_forward(obs, prepped, visits):
    """Replicates BLDuelingDQN.forward (explain=False): returns ((Q_values, state), visits)."""
    obs = obs.astype(jnp.int32)

    # self.visits[obs] += 1e-05  (duplicate indices write once, like PyTorch)
    flat_obs = obs.reshape(-1)
    visits = visits.at[flat_obs].set(visits[flat_obs] + 1e-05)

    obs_col = obs.reshape(-1, 1)                       # (B, 1)
    B = obs_col.shape[0]
    slab = prepped["slab"]
    A = prepped["action_shape"]
    s_pad = prepped["s_pad"]

    # Batch tiling: tiles of up to 256 rows (multiple of 8); pad B so every tile is full.
    TB = min(((B + 7) // 8) * 8, 256)
    B_pad = ((B + TB - 1) // TB) * TB
    if B_pad != B:
        obs_col = jnp.pad(obs_col, ((0, B_pad - B), (0, 0)))   # pad with valid index 0
    n_tiles = B_pad // TB

    out = pl.pallas_call(
        functools.partial(dueling_dqn_kernel, s_pad=s_pad),
        out_shape=jax.ShapeDtypeStruct((B_pad, LANE), jnp.float32),
        grid=(n_tiles,),
        in_specs=[
            pl.BlockSpec((TB, 1), lambda i: (i, 0)),       # per-tile observations
            pl.BlockSpec(slab.shape, lambda i: (0, 0)),    # slab VMEM-resident across tiles
        ],
        out_specs=pl.BlockSpec((TB, LANE), lambda i: (i, 0)),  # lane-dense output slab
        compiler_params=pltpu.CompilerParams(dimension_semantics=("parallel",)),
    )(obs_col, slab)

    q_values = out[:B, :A]
    state = None  # module passes `state` through unchanged
    return (q_values, state), visits


def reference_forward(obs, params, action_shape):
    """Pure-JAX reference of the PyTorch forward, for correctness checking."""
    x = jnp.squeeze(params["emb"][obs], axis=1)

    def lin(name, z):
        w, b = params[name]
        return z @ w.T + b

    def lrelu(z):
        return jnp.where(z >= 0, z, LEAKY_SLOPE * z)

    h = lrelu(lin("fc1", x))
    value = lin("fc_z_v", lrelu(lin("fc_h_v", h)))
    adv = lin("fc_z_a", lrelu(lin("fc_h_a", h)))
    return value + adv - adv.mean(axis=1, keepdims=True)


if __name__ == "__main__":
    state_shape = 500
    action_shape = 6
    number_of_nodes = [32, 32]
    batch = 8

    key = jax.random.PRNGKey(0)
    k_params, k_obs = jax.random.split(key)

    params = init_params(k_params, state_shape, action_shape, number_of_nodes)
    prepped = prepare_params(params, action_shape)            # one-time packing
    visits = jnp.zeros((500,), jnp.float32)                   # self.visits buffer
    obs = jax.random.randint(k_obs, (batch, 1), 0, state_shape, dtype=jnp.int32)

    (q_values, state), visits = bl_dueling_dqn_forward(obs, prepped, visits)
    q_values = jax.block_until_ready(q_values)

    q_ref = reference_forward(obs, params, action_shape)
    assert q_values.shape == (batch, action_shape)
    assert jnp.allclose(q_values, q_ref, atol=1e-5, rtol=1e-5), "mismatch vs reference"

    print("KERNEL_OK")
</pallas_src>

<mosaic_0001>
module attributes {stable_mosaic.version = 11 : i64} {
  func.func @dueling_dqn_kernel(%arg0: i32, %arg1: memref<8x1xi32, #tpu.memory_space<vmem>>, %arg2: memref<760x128xf32, #tpu.memory_space<vmem>>, %arg3: memref<8x128xf32, #tpu.memory_space<vmem>>) attributes {dimension_semantics = [#tpu.dimension_semantics<parallel>], iteration_bounds = array<i64: 1>, scalar_prefetch = 0 : i64, scratch_operands = 0 : i64, tpu.core_type = #tpu.core_type<tc>, window_params = [{transform_indices = @transform_0, window_bounds = array<i64: 8, 1>}, {pipeline_mode = #tpu.pipeline_mode<synchronous>, transform_indices = @transform_1, window_bounds = array<i64: 760, 128>}, {transform_indices = @transform_2, window_bounds = array<i64: 8, 128>}]} {
    %c0 = arith.constant 0 : index
    %c0_0 = arith.constant 0 : index
    %0 = vector.load %arg1[%c0, %c0_0] : memref<8x1xi32, #tpu.memory_space<vmem>>, vector<8x1xi32>
    %1 = tpu.iota {dimensions = array<i32: 1>} : vector<8x504xi32>
    %2 = vector.broadcast %0 : vector<8x1xi32> to vector<8x504xi32>
    %3 = arith.cmpi eq, %1, %2 : vector<8x504xi32>
    %4 = arith.extui %3 : vector<8x504xi1> to vector<8x504xi32>
    %5 = arith.sitofp %4 : vector<8x504xi32> to vector<8x504xf32>
    %c0_1 = arith.constant 0 : index
    %c0_2 = arith.constant 0 : index
    %6 = vector.load %arg2[%c0_1, %c0_2] : memref<760x128xf32, #tpu.memory_space<vmem>>, vector<504x128xf32>
    %cst = arith.constant dense<0.000000e+00> : vector<8x128xf32>
    %7 = tpu.matmul %5, %6, %cst {dimension_numbers = #tpu.dot_dimension_numbers<[1], [0], [0], [1], [0, 0, 1, 1], [], []>} : vector<8x504xf32>, vector<504x128xf32>, vector<8x128xf32> -> vector<8x128xf32>
    %cst_3 = arith.constant 0.00999999977 : f32
    %8 = vector.broadcast %cst_3 : f32 to vector<8x128xf32>
    %9 = arith.mulf %8, %7 : vector<8x128xf32>
    %10 = arith.maximumf %7, %9 : vector<8x128xf32>
    %c504 = arith.constant 504 : index
    %c0_4 = arith.constant 0 : index
    %11 = vector.load %arg2[%c504, %c0_4] : memref<760x128xf32, #tpu.memory_space<vmem>>, vector<128x128xf32>
    %cst_5 = arith.constant dense<0.000000e+00> : vector<8x128xf32>
    %12 = tpu.matmul %10, %11, %cst_5 {dimension_numbers = #tpu.dot_dimension_numbers<[1], [0], [0], [1], [0, 0, 1, 1], [], []>} : vector<8x128xf32>, vector<128x128xf32>, vector<8x128xf32> -> vector<8x128xf32>
    %cst_6 = arith.constant 0.00999999977 : f32
    %13 = vector.broadcast %cst_6 : f32 to vector<8x128xf32>
    %14 = arith.mulf %13, %12 : vector<8x128xf32>
    %15 = arith.maximumf %12, %14 : vector<8x128xf32>
    %c632 = arith.constant 632 : index
    %c0_7 = arith.constant 0 : index
    %16 = vector.load %arg2[%c632, %c0_7] : memref<760x128xf32, #tpu.memory_space<vmem>>, vector<128x128xf32>
    %cst_8 = arith.constant dense<0.000000e+00> : vector<8x128xf32>
    %17 = tpu.matmul %15, %16, %cst_8 {dimension_numbers = #tpu.dot_dimension_numbers<[1], [0], [0], [1], [0, 0, 1, 1], [], []>} : vector<8x128xf32>, vector<128x128xf32>, vector<8x128xf32> -> vector<8x128xf32>
    %c0_9 = arith.constant 0 : index
    %c0_10 = arith.constant 0 : index
    %18 = vector.load %arg3[%c0_9, %c0_10] : memref<8x128xf32, #tpu.memory_space<vmem>>, vector<8x128xf32>
    tpu.vector_store %arg3[%c0_9, %c0_10], %17 {strides = array<i32>} : memref<8x128xf32, #tpu.memory_space<vmem>>, vector<8x128xf32>,
    return
  }
  func.func @transform_0(%arg0: i32) -> (i32, i32) {
    %c0_i32 = arith.constant 0 : i32
    %c0_i32_0 = arith.constant 0 : i32
    return %arg0, %c0_i32 : i32, i32
  }
  func.func @transform_1(%arg0: i32) -> (i32, i32) {
    %c0_i32 = arith.constant 0 : i32
    %c0_i32_0 = arith.constant 0 : i32
    %c0_i32_1 = arith.constant 0 : i32
    return %c0_i32, %c0_i32_0 : i32, i32
  }
  func.func @transform_2(%arg0: i32) -> (i32, i32) {
    %c0_i32 = arith.constant 0 : i32
    %c0_i32_0 = arith.constant 0 : i32
    return %arg0, %c0_i32 : i32, i32
  }
}

</mosaic_0001>

<llo_original>
// kernel: tpu_custom_call.1
$region0: #{tpu_custom_call.1}
  #allocation0 [shape = 'u32[]', space=smem, size = 0x4, offset = 0x4, fixed_abs, tag = 'smem constant byte address 0x4 - core index']
  #allocation1 [shape = 'u32[144,128]{1,0:T(1,128)}', space=vmem, size = 0x12000, scoped, tag = 'internal scratch']
  %s0 = inlined_call_operand.vmem [shape: s32[8,1], index: 0, kind: input, shape index: {}]
  %s1 = inlined_call_operand.hbm [shape: f32[760,128], index: 1, kind: input, shape index: {}]
  %s2 = inlined_call_operand.hbm [shape: f32[8,128], index: 2, kind: output, shape index: {}]
  %s3 = sld [smem:[#allocation0]]
  $region22: #{tpu_custom_call.1} parent=0
    _
  %s5 = ssub.s32 1, %s3
  %s6 = scalar_select 0, %s5, %s3
  $region1: #{tpu_custom_call.1} parent=0
    #allocation2 [shape = 'u8[389120]{0}', space=vmem, size = 0x5f000, scoped, tag = 'input window, operand 1, single buffered']
    #allocation3 [shape = 's32[1]{0}', space=sflag, size = 0x4, scoped, tag = 'scoped memory for tpu_custom_call.1']
    #allocation4 [shape = 's32[1]{0}', space=sflag, size = 0x4, scoped, tag = 'scoped memory for tpu_custom_call.1']
    #allocation5 [shape = 'u8[4096]{0}', space=vmem, size = 0x1000, scoped, tag = 'output window, operand 0, single buffered']
    %7 = vsyncpa [#allocation3], 0
    %8 = vsyncpa [#allocation4], 0
    // Predicated region
    $region2: #{tpu_custom_call.1} parent=1 // pred_check
      _
    $region3: #{tpu_custom_call.1} parent=1 // pred_check_branch
      %10 = sbr.rel (0) target = $region5
    $region4: #{tpu_custom_call.1} parent=1 // pred_region
      _
    $region5: #{tpu_custom_call.1} parent=1 // pred_fallthru
      _
    // Predicated region
    $region6: #{tpu_custom_call.1} parent=1 // pred_check
      _
    $region7: #{tpu_custom_call.1} parent=1 // pred_check_branch
      %12 = sbr.rel (0) target = $region9
    $region8: #{tpu_custom_call.1} parent=1 // pred_region
      %s14 = ssub.s32 12160, 12160
      %15 = vsyncadd [#allocation3], %s14
      %s16 = sshll.u32 [#allocation2], 4
      %s17 = int_to_ptr.vmem [resolvable:$true] %s16
      %22 = dma.hbm_to_vmem [thread:$0]  %s1, 12160, %s17, [#allocation3], 128, 128, 8
    $region9: #{tpu_custom_call.1} parent=1 // pred_fallthru
      _
    // Predicated region
    $region10: #{tpu_custom_call.1} parent=1 // pred_check
      _
    $region11: #{tpu_custom_call.1} parent=1 // pred_check_branch
      %24 = sbr.rel (0) target = $region13
    $region12: #{tpu_custom_call.1} parent=1 // pred_region
      %25 = dma.done [#allocation3], 12160
    $region13: #{tpu_custom_call.1} parent=1 // pred_fallthru
      _
    %v26 = vld [vmem:[%s0] sm:$0xff]
    %v27 = vlaneseq
    %v28 = vand.u32 %v27, 127
    %v29 = vadd.s32 %v28, 128
    %v30 = vadd.s32 %v28, 256
    %v31 = vadd.s32 %v28, 384
    %32 = vset.pattern.permute.xlu0 0
    %33 = vperm.xlu0 %32, %v26
    %v34 = vpop.permute.xlu0 %33
    %vm35 = vcmp.eq.s32.totalorder %v28, %v34
    %vm36 = vcmp.eq.s32.totalorder %v29, %v34
    %vm37 = vcmp.eq.s32.totalorder %v30, %v34
    %vm38 = vcmp.eq.s32.totalorder %v31, %v34
    %v39 = vsel %vm35, 1, 0
    %v40 = vsel %vm36, 1, 0
    %v41 = vsel %vm37, 1, 0
    %v42 = vsel %vm38, 1, 0
    %v43 = vcvt.s32.f32 %v39
    %v44 = vcvt.s32.f32 %v40
    %v45 = vcvt.s32.f32 %v41
    %v46 = vcvt.s32.f32 %v42
    %v47 = vld [vmem:[#allocation2] sm:$0xff]
    %v48 = vld [vmem:[#allocation2 + $0x8] sm:$0xff]
    %v49 = vld [vmem:[#allocation2 + $0x10] sm:$0xff]
    %v50 = vld [vmem:[#allocation2 + $0x18] sm:$0xff]
    %v51 = vld [vmem:[#allocation2 + $0x20] sm:$0xff]
    %v52 = vld [vmem:[#allocation2 + $0x28] sm:$0xff]
    %v53 = vld [vmem:[#allocation2 + $0x30] sm:$0xff]
    %v54 = vld [vmem:[#allocation2 + $0x38] sm:$0xff]
    %v55 = vld [vmem:[#allocation2 + $0x40] sm:$0xff]
    %v56 = vld [vmem:[#allocation2 + $0x48] sm:$0xff]
    %v57 = vld [vmem:[#allocation2 + $0x50] sm:$0xff]
    %v58 = vld [vmem:[#allocation2 + $0x58] sm:$0xff]
    %v59 = vld [vmem:[#allocation2 + $0x60] sm:$0xff]
    %v60 = vld [vmem:[#allocation2 + $0x68] sm:$0xff]
    %v61 = vld [vmem:[#allocation2 + $0x70] sm:$0xff]
    %v62 = vld [vmem:[#allocation2 + $0x78] sm:$0xff]
    %v63 = vld [vmem:[#allocation2 + $0x80] sm:$0xff]
    %v64 = vld [vmem:[#allocation2 + $0x88] sm:$0xff]
    %v65 = vld [vmem:[#allocation2 + $0x90] sm:$0xff]
    %v66 = vld [vmem:[#allocation2 + $0x98] sm:$0xff]
    %v67 = vld [vmem:[#allocation2 + $0xa0] sm:$0xff]
    %v68 = vld [vmem:[#allocation2 + $0xa8] sm:$0xff]
    %v69 = vld [vmem:[#allocation2 + $0xb0] sm:$0xff]
    %v70 = vld [vmem:[#allocation2 + $0xb8] sm:$0xff]
    %v71 = vld [vmem:[#allocation2 + $0xc0] sm:$0xff]
    %v72 = vld [vmem:[#allocation2 + $0xc8] sm:$0xff]
    %v73 = vld [vmem:[#allocation2 + $0xd0] sm:$0xff]
    %v74 = vld [vmem:[#allocation2 + $0xd8] sm:$0xff]
    %v75 = vld [vmem:[#allocation2 + $0xe0] sm:$0xff]
    %v76 = vld [vmem:[#allocation2 + $0xe8] sm:$0xff]
    %v77 = vld [vmem:[#allocation2 + $0xf0] sm:$0xff]
    %v78 = vld [vmem:[#allocation2 + $0xf8] sm:$0xff]
    %v79 = vld [vmem:[#allocation2 + $0x100] sm:$0xff]
    %v80 = vld [vmem:[#allocation2 + $0x108] sm:$0xff]
    %v81 = vld [vmem:[#allocation2 + $0x110] sm:$0xff]
    %v82 = vld [vmem:[#allocation2 + $0x118] sm:$0xff]
    %v83 = vld [vmem:[#allocation2 + $0x120] sm:$0xff]
    %v84 = vld [vmem:[#allocation2 + $0x128] sm:$0xff]
    %v85 = vld [vmem:[#allocation2 + $0x130] sm:$0xff]
    %v86 = vld [vmem:[#allocation2 + $0x138] sm:$0xff]
    %v87 = vld [vmem:[#allocation2 + $0x140] sm:$0xff]
    %v88 = vld [vmem:[#allocation2 + $0x148] sm:$0xff]
    %v89 = vld [vmem:[#allocation2 + $0x150] sm:$0xff]
    %v90 = vld [vmem:[#allocation2 + $0x158] sm:$0xff]
    %v91 = vld [vmem:[#allocation2 + $0x160] sm:$0xff]
    %v92 = vld [vmem:[#allocation2 + $0x168] sm:$0xff]
    %v93 = vld [vmem:[#allocation2 + $0x170] sm:$0xff]
    %v94 = vld [vmem:[#allocation2 + $0x178] sm:$0xff]
    %v95 = vld [vmem:[#allocation2 + $0x180] sm:$0xff]
    %v96 = vld [vmem:[#allocation2 + $0x188] sm:$0xff]
    %v97 = vld [vmem:[#allocation2 + $0x190] sm:$0xff]
    %v98 = vld [vmem:[#allocation2 + $0x198] sm:$0xff]
    %v99 = vld [vmem:[#allocation2 + $0x1a0] sm:$0xff]
    %v100 = vld [vmem:[#allocation2 + $0x1a8] sm:$0xff]
    %v101 = vld [vmem:[#allocation2 + $0x1b0] sm:$0xff]
    %v102 = vld [vmem:[#allocation2 + $0x1b8] sm:$0xff]
    %v103 = vld [vmem:[#allocation2 + $0x1c0] sm:$0xff]
    %v104 = vld [vmem:[#allocation2 + $0x1c8] sm:$0xff]
    %v105 = vld [vmem:[#allocation2 + $0x1d0] sm:$0xff]
    %v106 = vld [vmem:[#allocation2 + $0x1d8] sm:$0xff]
    %v107 = vld [vmem:[#allocation2 + $0x1e0] sm:$0xff]
    %v108 = vld [vmem:[#allocation2 + $0x1e8] sm:$0xff]
    %v109 = vld [vmem:[#allocation2 + $0x1f0] sm:$0xff]
    %vm110 = vcmask 982016
    %v112 = vsel %vm110, %v46, 0
    %114 = vmatprep.subr.mxu0 0.0
    %115 = vmatpush1.msra.mxu0 %v62
    %116 = vmatprep.subr.mxu0 0.0
    %117 = vmatpush1.msra.mxu0 %v61
    %118 = vmatprep.subr.mxu0 0.0
    %119 = vmatpush1.msra.mxu0 %v60
    %120 = vmatprep.subr.mxu0 0.0
    %121 = vmatpush1.msra.mxu0 %v59
    %122 = vmatprep.subr.mxu0 0.0
    %123 = vmatpush1.msra.mxu0 %v58
    %124 = vmatprep.subr.mxu0 0.0
    %125 = vmatpush1.msra.mxu0 %v57
    %126 = vmatprep.subr.mxu0 0.0
    %127 = vmatpush1.msra.mxu0 %v56
    %128 = vmatprep.subr.mxu0 0.0
    %129 = vmatpush1.msra.mxu0 %v55
    %130 = vmatprep.subr.mxu0 0.0
    %131 = vmatpush1.msra.mxu0 %v54
    %132 = vmatprep.subr.mxu0 0.0
    %133 = vmatpush1.msra.mxu0 %v53
    %134 = vmatprep.subr.mxu0 0.0
    %135 = vmatpush1.msra.mxu0 %v52
    %136 = vmatprep.subr.mxu0 0.0
    %137 = vmatpush1.msra.mxu0 %v51
    %138 = vmatprep.subr.mxu0 0.0
    %139 = vmatpush1.msra.mxu0 %v50
    %140 = vmatprep.subr.mxu0 0.0
    %141 = vmatpush1.msra.mxu0 %v49
    %142 = vmatprep.subr.mxu0 0.0
    %143 = vmatpush1.msra.mxu0 %v48
    %144 = vmatprep.subr.mxu0 0.0
    %145 = vmatpush1.msra.mxu0 %v47
    %146 = vmatprep.subr.mxu0 0.0
    %147 = vmatpush2.msra.mxu0 %v78
    %148 = vmatprep.subr.mxu0 0.0
    %149 = vmatpush2.msra.mxu0 %v77
    %150 = vmatprep.subr.mxu0 0.0
    %151 = vmatpush2.msra.mxu0 %v76
    %152 = vmatprep.subr.mxu0 0.0
    %153 = vmatpush2.msra.mxu0 %v75
    %154 = vmatprep.subr.mxu0 0.0
    %155 = vmatpush2.msra.mxu0 %v74
    %156 = vmatprep.subr.mxu0 0.0
    %157 = vmatpush2.msra.mxu0 %v73
    %158 = vmatprep.subr.mxu0 0.0
    %159 = vmatpush2.msra.mxu0 %v72
    %160 = vmatprep.subr.mxu0 0.0
    %161 = vmatpush2.msra.mxu0 %v71
    %162 = vmatprep.subr.mxu0 0.0
    %163 = vmatpush2.msra.mxu0 %v70
    %164 = vmatprep.subr.mxu0 0.0
    %165 = vmatpush2.msra.mxu0 %v69
    %166 = vmatprep.subr.mxu0 0.0
    %167 = vmatpush2.msra.mxu0 %v68
    %168 = vmatprep.subr.mxu0 0.0
    %169 = vmatpush2.msra.mxu0 %v67
    %170 = vmatprep.subr.mxu0 0.0
    %171 = vmatpush2.msra.mxu0 %v66
    %172 = vmatprep.subr.mxu0 0.0
    %173 = vmatpush2.msra.mxu0 %v65
    %174 = vmatprep.subr.mxu0 0.0
    %175 = vmatpush2.msra.mxu0 %v64
    %176 = vmatprep.subr.mxu0 0.0
    %177 = vmatpush2.msra.mxu0 %v63
    %178 = vmatprep.mubr.f32.mxu0 %v44
    %179 = vmatmul.mubr.f32.gmra.mxu0 %v43
    %v180 = vpop.f32.mrf.mxu0
    %v181 = vadd.f32 0.0, %v180
    %v182 = vpop.f32.mrf.mxu0
    %183 = vdwg.mxu0
    %184 = vmatprep.subr.mxu0 0.0
    %185 = vmatpush1.msra.mxu0 %v94
    %186 = vmatprep.subr.mxu0 0.0
    %187 = vmatpush1.msra.mxu0 %v93
    %188 = vmatprep.subr.mxu0 0.0
    %189 = vmatpush1.msra.mxu0 %v92
    %190 = vmatprep.subr.mxu0 0.0
    %191 = vmatpush1.msra.mxu0 %v91
    %192 = vmatprep.subr.mxu0 0.0
    %193 = vmatpush1.msra.mxu0 %v90
    %194 = vmatprep.subr.mxu0 0.0
    %195 = vmatpush1.msra.mxu0 %v89
    %196 = vmatprep.subr.mxu0 0.0
    %197 = vmatpush1.msra.mxu0 %v88
    %198 = vmatprep.subr.mxu0 0.0
    %199 = vmatpush1.msra.mxu0 %v87
    %200 = vmatprep.subr.mxu0 0.0
    %201 = vmatpush1.msra.mxu0 %v86
    %202 = vmatprep.subr.mxu0 0.0
    %203 = vmatpush1.msra.mxu0 %v85
    %204 = vmatprep.subr.mxu0 0.0
    %205 = vmatpush1.msra.mxu0 %v84
    %206 = vmatprep.subr.mxu0 0.0
    %207 = vmatpush1.msra.mxu0 %v83
    %208 = vmatprep.subr.mxu0 0.0
    %209 = vmatpush1.msra.mxu0 %v82
    %210 = vmatprep.subr.mxu0 0.0
    %211 = vmatpush1.msra.mxu0 %v81
    %212 = vmatprep.subr.mxu0 0.0
    %213 = vmatpush1.msra.mxu0 %v80
    %214 = vmatprep.subr.mxu0 0.0
    %215 = vmatpush1.msra.mxu0 %v79
    %216 = vmatprep.subr.mxu0 0.0
    %217 = vmatpush2.msra.mxu0 0.0
    %218 = vmatprep.subr.mxu0 0.0
    %219 = vmatpush2.msra.mxu0 %v109
    %220 = vmatprep.subr.mxu0 0.0
    %221 = vmatpush2.msra.mxu0 %v108
    %222 = vmatprep.subr.mxu0 0.0
    %223 = vmatpush2.msra.mxu0 %v107
    %224 = vmatprep.subr.mxu0 0.0
    %225 = vmatpush2.msra.mxu0 %v106
    %226 = vmatprep.subr.mxu0 0.0
    %227 = vmatpush2.msra.mxu0 %v105
    %228 = vmatprep.subr.mxu0 0.0
    %229 = vmatpush2.msra.mxu0 %v104
    %230 = vmatprep.subr.mxu0 0.0
    %231 = vmatpush2.msra.mxu0 %v103
    %232 = vmatprep.subr.mxu0 0.0
    %233 = vmatpush2.msra.mxu0 %v102
    %234 = vmatprep.subr.mxu0 0.0
    %235 = vmatpush2.msra.mxu0 %v101
    %236 = vmatprep.subr.mxu0 0.0
    %237 = vmatpush2.msra.mxu0 %v100
    %238 = vmatprep.subr.mxu0 0.0
    %239 = vmatpush2.msra.mxu0 %v99
    %240 = vmatprep.subr.mxu0 0.0
    %241 = vmatpush2.msra.mxu0 %v98
    %242 = vmatprep.subr.mxu0 0.0
    %243 = vmatpush2.msra.mxu0 %v97
    %244 = vmatprep.subr.mxu0 0.0
    %245 = vmatpush2.msra.mxu0 %v96
    %246 = vmatprep.subr.mxu0 0.0
    %247 = vmatpush2.msra.mxu0 %v95
    %248 = vmatprep.mubr.f32.mxu0 %v112
    %249 = vmatmul.mubr.f32.gmra.mxu0 %v45
    %v250 = vpop.f32.mrf.mxu0
    %v251 = vadd.f32 %v181, %v250
    %v252 = vpop.f32.mrf.mxu0
    %253 = vdwg.mxu0
    %v254 = vmul.f32 %v251, 0.01
    %v255 = vmax.f32 %v251, %v254
    %v256 = vld [vmem:[#allocation2 + $0x1f8] sm:$0xff]
    %v257 = vld [vmem:[#allocation2 + $0x200] sm:$0xff]
    %v258 = vld [vmem:[#allocation2 + $0x208] sm:$0xff]
    %v259 = vld [vmem:[#allocation2 + $0x210] sm:$0xff]
    %v260 = vld [vmem:[#allocation2 + $0x218] sm:$0xff]
    %v261 = vld [vmem:[#allocation2 + $0x220] sm:$0xff]
    %v262 = vld [vmem:[#allocation2 + $0x228] sm:$0xff]
    %v263 = vld [vmem:[#allocation2 + $0x230] sm:$0xff]
    %v264 = vld [vmem:[#allocation2 + $0x238] sm:$0xff]
    %v265 = vld [vmem:[#allocation2 + $0x240] sm:$0xff]
    %v266 = vld [vmem:[#allocation2 + $0x248] sm:$0xff]
    %v267 = vld [vmem:[#allocation2 + $0x250] sm:$0xff]
    %v268 = vld [vmem:[#allocation2 + $0x258] sm:$0xff]
    %v269 = vld [vmem:[#allocation2 + $0x260] sm:$0xff]
    %v270 = vld [vmem:[#allocation2 + $0x268] sm:$0xff]
    %v271 = vld [vmem:[#allocation2 + $0x270] sm:$0xff]
    %272 = vmatprep.subr.mxu0 0.0
    %273 = vmatpush1.msra.mxu0 %v271
    %274 = vmatprep.subr.mxu0 0.0
    %275 = vmatpush1.msra.mxu0 %v270
    %276 = vmatprep.subr.mxu0 0.0
    %277 = vmatpush1.msra.mxu0 %v269
    %278 = vmatprep.subr.mxu0 0.0
    %279 = vmatpush1.msra.mxu0 %v268
    %280 = vmatprep.subr.mxu0 0.0
    %281 = vmatpush1.msra.mxu0 %v267
    %282 = vmatprep.subr.mxu0 0.0
    %283 = vmatpush1.msra.mxu0 %v266
    %284 = vmatprep.subr.mxu0 0.0
    %285 = vmatpush1.msra.mxu0 %v265
    %286 = vmatprep.subr.mxu0 0.0
    %287 = vmatpush1.msra.mxu0 %v264
    %288 = vmatprep.subr.mxu0 0.0
    %289 = vmatpush1.msra.mxu0 %v263
    %290 = vmatprep.subr.mxu0 0.0
    %291 = vmatpush1.msra.mxu0 %v262
    %292 = vmatprep.subr.mxu0 0.0
    %293 = vmatpush1.msra.mxu0 %v261
    %294 = vmatprep.subr.mxu0 0.0
    %295 = vmatpush1.msra.mxu0 %v260
    %296 = vmatprep.subr.mxu0 0.0
    %297 = vmatpush1.msra.mxu0 %v259
    %298 = vmatprep.subr.mxu0 0.0
    %299 = vmatpush1.msra.mxu0 %v258
    %300 = vmatprep.subr.mxu0 0.0
    %301 = vmatpush1.msra.mxu0 %v257
    %302 = vmatprep.subr.mxu0 0.0
    %303 = vmatpush1.msra.mxu0 %v256
    %304 = vmatprep.subr.mxu0 0.0
    %305 = vmatpush2.msra.mxu0 0.0
    %306 = vmatprep.subr.mxu0 0.0
    %307 = vmatpush2.msra.mxu0 0.0
    %308 = vmatprep.subr.mxu0 0.0
    %309 = vmatpush2.msra.mxu0 0.0
    %310 = vmatprep.subr.mxu0 0.0
    %311 = vmatpush2.msra.mxu0 0.0
    %312 = vmatprep.subr.mxu0 0.0
    %313 = vmatpush2.msra.mxu0 0.0
    %314 = vmatprep.subr.mxu0 0.0
    %315 = vmatpush2.msra.mxu0 0.0
    %316 = vmatprep.subr.mxu0 0.0
    %317 = vmatpush2.msra.mxu0 0.0
    %318 = vmatprep.subr.mxu0 0.0
    %319 = vmatpush2.msra.mxu0 0.0
    %320 = vmatprep.subr.mxu0 0.0
    %321 = vmatpush2.msra.mxu0 0.0
    %322 = vmatprep.subr.mxu0 0.0
    %323 = vmatpush2.msra.mxu0 0.0
    %324 = vmatprep.subr.mxu0 0.0
    %325 = vmatpush2.msra.mxu0 0.0
    %326 = vmatprep.subr.mxu0 0.0
    %327 = vmatpush2.msra.mxu0 0.0
    %328 = vmatprep.subr.mxu0 0.0
    %329 = vmatpush2.msra.mxu0 0.0
    %330 = vmatprep.subr.mxu0 0.0
    %331 = vmatpush2.msra.mxu0 0.0
    %332 = vmatprep.subr.mxu0 0.0
    %333 = vmatpush2.msra.mxu0 0.0
    %334 = vmatprep.subr.mxu0 0.0
    %335 = vmatpush2.msra.mxu0 0.0
    %336 = vmatprep.mubr.f32.mxu0 0.0
    %337 = vmatmul.mubr.f32.gmra.mxu0 %v255
    %v338 = vpop.f32.mrf.mxu0
    %v339 = vadd.f32 0.0, %v338
    %v340 = vpop.f32.mrf.mxu0
    %341 = vdwg.mxu0
    %v342 = vmul.f32 %v339, 0.01
    %v343 = vmax.f32 %v339, %v342
    %v344 = vld [vmem:[#allocation2 + $0x278] sm:$0xff]
    %v345 = vld [vmem:[#allocation2 + $0x280] sm:$0xff]
    %v346 = vld [vmem:[#allocation2 + $0x288] sm:$0xff]
    %v347 = vld [vmem:[#allocation2 + $0x290] sm:$0xff]
    %v348 = vld [vmem:[#allocation2 + $0x298] sm:$0xff]
    %v349 = vld [vmem:[#allocation2 + $0x2a0] sm:$0xff]
    %v350 = vld [vmem:[#allocation2 + $0x2a8] sm:$0xff]
    %v351 = vld [vmem:[#allocation2 + $0x2b0] sm:$0xff]
    %v352 = vld [vmem:[#allocation2 + $0x2b8] sm:$0xff]
    %v353 = vld [vmem:[#allocation2 + $0x2c0] sm:$0xff]
    %v354 = vld [vmem:[#allocation2 + $0x2c8] sm:$0xff]
    %v355 = vld [vmem:[#allocation2 + $0x2d0] sm:$0xff]
    %v356 = vld [vmem:[#allocation2 + $0x2d8] sm:$0xff]
    %v357 = vld [vmem:[#allocation2 + $0x2e0] sm:$0xff]
    %v358 = vld [vmem:[#allocation2 + $0x2e8] sm:$0xff]
    %v359 = vld [vmem:[#allocation2 + $0x2f0] sm:$0xff]
    %360 = vmatprep.subr.mxu0 0.0
    %361 = vmatpush1.msra.mxu0 %v359
    %362 = vmatprep.subr.mxu0 0.0
    %363 = vmatpush1.msra.mxu0 %v358
    %364 = vmatprep.subr.mxu0 0.0
    %365 = vmatpush1.msra.mxu0 %v357
    %366 = vmatprep.subr.mxu0 0.0
    %367 = vmatpush1.msra.mxu0 %v356
    %368 = vmatprep.subr.mxu0 0.0
    %369 = vmatpush1.msra.mxu0 %v355
    %370 = vmatprep.subr.mxu0 0.0
    %371 = vmatpush1.msra.mxu0 %v354
    %372 = vmatprep.subr.mxu0 0.0
    %373 = vmatpush1.msra.mxu0 %v353
    %374 = vmatprep.subr.mxu0 0.0
    %375 = vmatpush1.msra.mxu0 %v352
    %376 = vmatprep.subr.mxu0 0.0
    %377 = vmatpush1.msra.mxu0 %v351
    %378 = vmatprep.subr.mxu0 0.0
    %379 = vmatpush1.msra.mxu0 %v350
    %380 = vmatprep.subr.mxu0 0.0
    %381 = vmatpush1.msra.mxu0 %v349
    %382 = vmatprep.subr.mxu0 0.0
    %383 = vmatpush1.msra.mxu0 %v348
    %384 = vmatprep.subr.mxu0 0.0
    %385 = vmatpush1.msra.mxu0 %v347
    %386 = vmatprep.subr.mxu0 0.0
    %387 = vmatpush1.msra.mxu0 %v346
    %388 = vmatprep.subr.mxu0 0.0
    %389 = vmatpush1.msra.mxu0 %v345
    %390 = vmatprep.subr.mxu0 0.0
    %391 = vmatpush1.msra.mxu0 %v344
    %392 = vmatprep.subr.mxu0 0.0
    %393 = vmatpush2.msra.mxu0 0.0
    %394 = vmatprep.subr.mxu0 0.0
    %395 = vmatpush2.msra.mxu0 0.0
    %396 = vmatprep.subr.mxu0 0.0
    %397 = vmatpush2.msra.mxu0 0.0
    %398 = vmatprep.subr.mxu0 0.0
    %399 = vmatpush2.msra.mxu0 0.0
    %400 = vmatprep.subr.mxu0 0.0
    %401 = vmatpush2.msra.mxu0 0.0
    %402 = vmatprep.subr.mxu0 0.0
    %403 = vmatpush2.msra.mxu0 0.0
    %404 = vmatprep.subr.mxu0 0.0
    %405 = vmatpush2.msra.mxu0 0.0
    %406 = vmatprep.subr.mxu0 0.0
    %407 = vmatpush2.msra.mxu0 0.0
    %408 = vmatprep.subr.mxu0 0.0
    %409 = vmatpush2.msra.mxu0 0.0
    %410 = vmatprep.subr.mxu0 0.0
    %411 = vmatpush2.msra.mxu0 0.0
    %412 = vmatprep.subr.mxu0 0.0
    %413 = vmatpush2.msra.mxu0 0.0
    %414 = vmatprep.subr.mxu0 0.0
    %415 = vmatpush2.msra.mxu0 0.0
    %416 = vmatprep.subr.mxu0 0.0
    %417 = vmatpush2.msra.mxu0 0.0
    %418 = vmatprep.subr.mxu0 0.0
    %419 = vmatpush2.msra.mxu0 0.0
    %420 = vmatprep.subr.mxu0 0.0
    %421 = vmatpush2.msra.mxu0 0.0
    %422 = vmatprep.subr.mxu0 0.0
    %423 = vmatpush2.msra.mxu0 0.0
    %424 = vmatprep.mubr.f32.mxu0 0.0
    %425 = vmatmul.mubr.f32.gmra.mxu0 %v343
    %v426 = vpop.f32.mrf.mxu0
    %v427 = vadd.f32 0.0, %v426
    %v428 = vpop.f32.mrf.mxu0
    %429 = vdwg.mxu0
    %430 = vst [vmem:[#allocation5] sm:$0xff] %v427
    // Predicated region
    $region14: #{tpu_custom_call.1} parent=1 // pred_check
      _
    $region15: #{tpu_custom_call.1} parent=1 // pred_check_branch
      %432 = sbr.rel (0) target = $region17
    $region16: #{tpu_custom_call.1} parent=1 // pred_region
      %s434 = ssub.s32 128, 128
      %435 = vsyncadd [#allocation4], %s434
      %s437 = sshll.u32 [#allocation5], 4
      %s438 = int_to_ptr.vmem [resolvable:$true] %s437
      %440 = dma.vmem_to_hbm [thread:$0]  %s438, 128, %s2, [#allocation4]
    $region17: #{tpu_custom_call.1} parent=1 // pred_fallthru
      _
    // Predicated region
    $region18: #{tpu_custom_call.1} parent=1 // pred_check
      _
    $region19: #{tpu_custom_call.1} parent=1 // pred_check_branch
      %442 = sbr.rel (0) target = $region21
    $region20: #{tpu_custom_call.1} parent=1 // pred_region
      %443 = dma.done [#allocation4], 128
    $region21: #{tpu_custom_call.1} parent=1 // pred_fallthru
      _
    %444 = vsyncpa [#allocation3], 1
    %445 = vsyncpa [#allocation4], 1

</llo_original>
